<compile_context>
chip_gen: v7x
topology: tpu7x:2x2x1
jax: 0.10.0
libtpu: 0.0.40
codegen_flags: <defaults>
</compile_context>

<pallas_src>
import jax
import jax.numpy as jnp
import numpy as np
from jax import lax
from jax.experimental import pallas as pl
from jax.experimental.pallas import tpu as pltpu

BBOX = (8, 8)          # (W, H), square so the antialiased Resize is an identity
BW, BH = BBOX
EMBED_DIM = 32
MEAN = 0.0             # Normalize(mean=[0.0], std=[1.0])
STD = 1.0
TILE_N = 8             # nodes per grid step (use 128-512 for real node counts)
LANE = 128


def _feature_kernel(xlo_ref, ylo_ref, img_ref, w_ref, b_ref, colk_ref, colj_ref,
                    out_ref, flat_ref):
    """Grid axis 0 = node tile. Crop TILE_N patches, flatten, project in one matmul."""
    t = pl.program_id(0)
    W = img_ref.shape[1]
    P = BH * BW

    # Hoisted per-tile constants (JAX does not CSE broadcasts; build them once,
    # not inside the per-node loop).
    w_iota = lax.broadcasted_iota(jnp.int32, (W, P), 0)       # image column id
    w_minus_k = w_iota - colk_ref[...]                        # (W, P); == xlo selects col
    j_iota = lax.broadcasted_iota(jnp.int32, (BH, P), 0)      # patch row id
    diag = (j_iota == colj_ref[...]).astype(jnp.float32)      # (BH, P) block-diag mask

    # Gather + flatten TILE_N patches into the (TILE_N, P) VMEM scratch.
    for i in range(TILE_N):
        n = t * TILE_N + i
        xlo = xlo_ref[n]                                      # SMEM scalars (prefetched)
        ylo = ylo_ref[n]
        # Row crop: dynamic sublane slice of the VMEM-resident image.
        strip = img_ref[pl.ds(ylo, BH), :]                    # (BH, W)
        # Column crop + flatten in one MXU op: big[j, j'*BW+k] = strip[j, xlo+k],
        # then keep only the block-diagonal entries (j == j') and reduce rows.
        sel = (w_minus_k == xlo).astype(jnp.float32)          # (W, P)
        big = jnp.dot(strip, sel, preferred_element_type=jnp.float32)   # (BH, P)
        flat_ref[i:i + 1, :] = jnp.sum(big * diag, axis=0, keepdims=True)

    # One lane-dense projection for the whole node tile:
    # (TILE_N, P) @ (P, D_pad) + bias, stored as a full (TILE_N, 128) block.
    out_ref[...] = jnp.dot(flat_ref[...], w_ref[...],
                           preferred_element_type=jnp.float32) + b_ref[...]


def feature_extractor(image, node_x, node_y, w_full, bias):
    """image: (H, W) f32. node_x/node_y: (N,) int node coords.
    w_full: (3*bh*bw, D) linear weight (C-order flatten: c, y, x). bias: (D,).
    Returns (image, features) with features of shape (N, D)."""
    bw, bh = BBOX
    H, W = image.shape
    n_nodes = node_x.shape[0]
    d = w_full.shape[1]
    P = bh * bw

    # x_low = int(x - bbox_w/2), y_low = int(y - bbox_h/2)  (as in the module).
    # OOB policy: clamp so every crop stays fully in bounds (documented choice).
    x_low = jnp.clip((node_x - bw // 2).astype(jnp.int32), 0, W - bw)
    y_low = jnp.clip((node_y - bh // 2).astype(jnp.int32), 0, H - bh)

    # Pad node count to a multiple of TILE_N; padded crops read the (0,0) corner
    # and are discarded after the call.
    n_pad = ((n_nodes + TILE_N - 1) // TILE_N) * TILE_N
    pad = n_pad - n_nodes
    x_low = jnp.pad(x_low, (0, pad))
    y_low = jnp.pad(y_low, (0, pad))

    # expand(1, 3, ...) makes the 3 channels identical -> fold channel axis of W.
    w_eff = w_full.reshape(3, bh, bw, d).sum(axis=0)           # (bh, bw, D)
    # Fold Normalize((x - MEAN)/STD) into the weights/bias (free at trace time).
    w_norm = w_eff / STD
    b_norm = bias - (MEAN / STD) * w_eff.sum(axis=(0, 1))
    # Flatten for the single matmul and pad D to a lane-dense multiple of 128.
    d_pad = ((d + LANE - 1) // LANE) * LANE
    w_flat = jnp.zeros((P, d_pad), jnp.float32).at[:, :d].set(
        w_norm.reshape(P, d).astype(jnp.float32))
    b_flat = jnp.zeros((1, d_pad), jnp.float32).at[:, :d].set(
        b_norm.reshape(1, d).astype(jnp.float32))

    # Small helper index rows (computed in plain JAX so the kernel needs no
    # integer div/mod): col_k[c] = c % bw (within-patch col), col_j[c] = c // bw.
    cols = jnp.arange(P, dtype=jnp.int32)
    col_k = (cols % bw).reshape(1, P)
    col_j = (cols // bw).reshape(1, P)

    num_tiles = n_pad // TILE_N

    # NOTE: for large images on v7x (64 MiB VMEM), switch the image input to
    # memory_space=pl.ANY and DMA only the [ylo:ylo+bh, :] strips per tile.
    feats = pl.pallas_call(
        _feature_kernel,
        out_shape=jax.ShapeDtypeStruct((n_pad, d_pad), jnp.float32),
        grid_spec=pltpu.PrefetchScalarGridSpec(
            num_scalar_prefetch=2,                              # x_low, y_low -> SMEM
            grid=(num_tiles,),
            in_specs=[
                pl.BlockSpec((H, W), lambda t, xlo, ylo: (0, 0)),
                pl.BlockSpec((P, d_pad), lambda t, xlo, ylo: (0, 0)),
                pl.BlockSpec((1, d_pad), lambda t, xlo, ylo: (0, 0)),
                pl.BlockSpec((1, P), lambda t, xlo, ylo: (0, 0)),
                pl.BlockSpec((1, P), lambda t, xlo, ylo: (0, 0)),
            ],
            out_specs=pl.BlockSpec((TILE_N, d_pad), lambda t, xlo, ylo: (t, 0)),
            scratch_shapes=[pltpu.VMEM((TILE_N, P), jnp.float32)],
        ),
        compiler_params=pltpu.CompilerParams(
            dimension_semantics=("parallel",)),                 # node tiles independent
    )(x_low, y_low, image.astype(jnp.float32), w_flat, b_flat, col_k, col_j)

    # module returns the (un-modified, reshaped-back) image alongside the graph
    return image, feats[:n_nodes, :d]


def _reference(image, x_low, y_low, w_full, bias):
    bw, bh = BBOX
    img = np.asarray(image)
    w = np.asarray(w_full)
    b = np.asarray(bias)
    feats = []
    for xl, yl in zip(np.asarray(x_low), np.asarray(y_low)):
        patch = img[yl:yl + bh, xl:xl + bw]
        patch = (patch - MEAN) / STD
        p3 = np.broadcast_to(patch, (3, bh, bw))                # expand(1,3,bh,bw)
        feats.append(p3.reshape(-1) @ w + b)                    # synthetic linear model
    return np.stack(feats)


if __name__ == "__main__":
    key = jax.random.PRNGKey(0)
    k_img, k_w, k_b, k_x, k_y = jax.random.split(key, 5)

    H, W = 16, 16
    n_nodes = 8
    bw, bh = BBOX

    image = jax.random.normal(k_img, (H, W), jnp.float32)
    # node coordinates chosen so each bbox crop stays in-bounds
    node_x = jax.random.randint(k_x, (n_nodes,), bw // 2, W - bw // 2 + 1)
    node_y = jax.random.randint(k_y, (n_nodes,), bh // 2, H - bh // 2 + 1)

    w_full = jax.random.normal(k_w, (3 * bh * bw, EMBED_DIM), jnp.float32) * 0.05
    bias = jax.random.normal(k_b, (EMBED_DIM,), jnp.float32) * 0.05

    out_img, feats = feature_extractor(image, node_x, node_y, w_full, bias)
    feats = jax.block_until_ready(feats)

    ref = _reference(image,
                     np.asarray(node_x) - bw // 2,
                     np.asarray(node_y) - bh // 2,
                     w_full, bias)
    np.testing.assert_allclose(np.asarray(feats), ref, rtol=1e-5, atol=1e-5)
    # TODO(synk): networkx graph dict mutation (node attribute writeback) has no
    # Pallas equivalent; embeddings are returned as a dense (N, D) array instead.
    print("KERNEL_OK")
</pallas_src>

<mosaic_0001>
module attributes {stable_mosaic.version = 11 : i64} {
  func.func @_feature_kernel(%arg0: i32, %arg1: memref<8xi32, #tpu.memory_space<smem>>, %arg2: memref<8xi32, #tpu.memory_space<smem>>, %arg3: memref<16x16xf32, #tpu.memory_space<vmem>>, %arg4: memref<64x128xf32, #tpu.memory_space<vmem>>, %arg5: memref<1x128xf32, #tpu.memory_space<vmem>>, %arg6: memref<1x64xi32, #tpu.memory_space<vmem>>, %arg7: memref<1x64xi32, #tpu.memory_space<vmem>>, %arg8: memref<8x128xf32, #tpu.memory_space<vmem>>, %arg9: memref<8x64xf32, #tpu.memory_space<vmem>>) attributes {dimension_semantics = [#tpu.dimension_semantics<parallel>], iteration_bounds = array<i64: 1>, scalar_prefetch = 2 : i64, scratch_operands = 1 : i64, tpu.core_type = #tpu.core_type<tc>, window_params = [{pipeline_mode = #tpu.pipeline_mode<synchronous>, transform_indices = @transform_0, window_bounds = array<i64: 16, 16>}, {pipeline_mode = #tpu.pipeline_mode<synchronous>, transform_indices = @transform_1, window_bounds = array<i64: 64, 128>}, {pipeline_mode = #tpu.pipeline_mode<synchronous>, transform_indices = @transform_2, window_bounds = array<i64: 1, 128>}, {pipeline_mode = #tpu.pipeline_mode<synchronous>, transform_indices = @transform_3, window_bounds = array<i64: 1, 64>}, {pipeline_mode = #tpu.pipeline_mode<synchronous>, transform_indices = @transform_4, window_bounds = array<i64: 1, 64>}, {transform_indices = @transform_5, window_bounds = array<i64: 8, 128>}]} {
    %0 = tpu.iota {dimensions = array<i32: 0>} : vector<16x64xi32>
    %c0 = arith.constant 0 : index
    %c0_0 = arith.constant 0 : index
    %1 = vector.load %arg6[%c0, %c0_0] : memref<1x64xi32, #tpu.memory_space<vmem>>, vector<1x64xi32>
    %2 = vector.broadcast %1 : vector<1x64xi32> to vector<16x64xi32>
    %3 = arith.subi %0, %2 : vector<16x64xi32>
    %4 = tpu.iota {dimensions = array<i32: 0>} : vector<8x64xi32>
    %c0_1 = arith.constant 0 : index
    %c0_2 = arith.constant 0 : index
    %5 = vector.load %arg7[%c0_1, %c0_2] : memref<1x64xi32, #tpu.memory_space<vmem>>, vector<1x64xi32>
    %6 = vector.broadcast %5 : vector<1x64xi32> to vector<8x64xi32>
    %7 = arith.cmpi eq, %4, %6 : vector<8x64xi32>
    %8 = arith.extui %7 : vector<8x64xi1> to vector<8x64xi32>
    %9 = arith.sitofp %8 : vector<8x64xi32> to vector<8x64xf32>
    %c8_i32 = arith.constant 8 : i32
    %10 = arith.muli %arg0, %c8_i32 : i32
    %c0_i32 = arith.constant 0 : i32
    %11 = arith.addi %10, %c0_i32 : i32
    %12 = arith.index_cast %11 : i32 to index
    %13 = memref.load %arg1[%12] : memref<8xi32, #tpu.memory_space<smem>>
    %14 = arith.index_cast %11 : i32 to index
    %15 = memref.load %arg2[%14] : memref<8xi32, #tpu.memory_space<smem>>
    %16 = arith.index_cast %15 : i32 to index
    %c0_3 = arith.constant 0 : index
    %17 = vector.load %arg3[%16, %c0_3] : memref<16x16xf32, #tpu.memory_space<vmem>>, vector<8x16xf32>
    %18 = vector.broadcast %13 : i32 to vector<16x64xi32>
    %19 = arith.cmpi eq, %3, %18 : vector<16x64xi32>
    %20 = arith.extui %19 : vector<16x64xi1> to vector<16x64xi32>
    %21 = arith.sitofp %20 : vector<16x64xi32> to vector<16x64xf32>
    %cst = arith.constant dense<0.000000e+00> : vector<8x64xf32>
    %22 = tpu.matmul %17, %21, %cst {dimension_numbers = #tpu.dot_dimension_numbers<[1], [0], [0], [1], [0, 0, 1, 1], [], []>} : vector<8x16xf32>, vector<16x64xf32>, vector<8x64xf32> -> vector<8x64xf32>
    %23 = arith.mulf %22, %9 : vector<8x64xf32>
    %cst_4 = arith.constant dense<0.000000e+00> : vector<64xf32>
    %24 = vector.multi_reduction <add>, %23, %cst_4 [0] : vector<8x64xf32> to vector<64xf32>
    %25 = vector.shape_cast %24 : vector<64xf32> to vector<1x64xf32>
    %c0_5 = arith.constant 0 : index
    %c0_6 = arith.constant 0 : index
    %26 = vector.load %arg9[%c0_5, %c0_6] : memref<8x64xf32, #tpu.memory_space<vmem>>, vector<1x64xf32>
    tpu.vector_store %arg9[%c0_5, %c0_6], %25 {strides = array<i32>} : memref<8x64xf32, #tpu.memory_space<vmem>>, vector<1x64xf32>,
    %c8_i32_7 = arith.constant 8 : i32
    %27 = arith.muli %arg0, %c8_i32_7 : i32
    %c1_i32 = arith.constant 1 : i32
    %28 = arith.addi %27, %c1_i32 : i32
    %29 = arith.index_cast %28 : i32 to index
    %30 = memref.load %arg1[%29] : memref<8xi32, #tpu.memory_space<smem>>
    %31 = arith.index_cast %28 : i32 to index
    %32 = memref.load %arg2[%31] : memref<8xi32, #tpu.memory_space<smem>>
    %33 = arith.index_cast %32 : i32 to index
    %c0_8 = arith.constant 0 : index
    %34 = vector.load %arg3[%33, %c0_8] : memref<16x16xf32, #tpu.memory_space<vmem>>, vector<8x16xf32>
    %35 = vector.broadcast %30 : i32 to vector<16x64xi32>
    %36 = arith.cmpi eq, %3, %35 : vector<16x64xi32>
    %37 = arith.extui %36 : vector<16x64xi1> to vector<16x64xi32>
    %38 = arith.sitofp %37 : vector<16x64xi32> to vector<16x64xf32>
    %cst_9 = arith.constant dense<0.000000e+00> : vector<8x64xf32>
    %39 = tpu.matmul %34, %38, %cst_9 {dimension_numbers = #tpu.dot_dimension_numbers<[1], [0], [0], [1], [0, 0, 1, 1], [], []>} : vector<8x16xf32>, vector<16x64xf32>, vector<8x64xf32> -> vector<8x64xf32>
    %40 = arith.mulf %39, %9 : vector<8x64xf32>
    %cst_10 = arith.constant dense<0.000000e+00> : vector<64xf32>
    %41 = vector.multi_reduction <add>, %40, %cst_10 [0] : vector<8x64xf32> to vector<64xf32>
    %42 = vector.shape_cast %41 : vector<64xf32> to vector<1x64xf32>
    %c1 = arith.constant 1 : index
    %c0_11 = arith.constant 0 : index
    %43 = vector.load %arg9[%c1, %c0_11] : memref<8x64xf32, #tpu.memory_space<vmem>>, vector<1x64xf32>
    tpu.vector_store %arg9[%c1, %c0_11], %42 {strides = array<i32>} : memref<8x64xf32, #tpu.memory_space<vmem>>, vector<1x64xf32>,
    %c8_i32_12 = arith.constant 8 : i32
    %44 = arith.muli %arg0, %c8_i32_12 : i32
    %c2_i32 = arith.constant 2 : i32
    %45 = arith.addi %44, %c2_i32 : i32
    %46 = arith.index_cast %45 : i32 to index
    %47 = memref.load %arg1[%46] : memref<8xi32, #tpu.memory_space<smem>>
    %48 = arith.index_cast %45 : i32 to index
    %49 = memref.load %arg2[%48] : memref<8xi32, #tpu.memory_space<smem>>
    %50 = arith.index_cast %49 : i32 to index
    %c0_13 = arith.constant 0 : index
    %51 = vector.load %arg3[%50, %c0_13] : memref<16x16xf32, #tpu.memory_space<vmem>>, vector<8x16xf32>
    %52 = vector.broadcast %47 : i32 to vector<16x64xi32>
    %53 = arith.cmpi eq, %3, %52 : vector<16x64xi32>
    %54 = arith.extui %53 : vector<16x64xi1> to vector<16x64xi32>
    %55 = arith.sitofp %54 : vector<16x64xi32> to vector<16x64xf32>
    %cst_14 = arith.constant dense<0.000000e+00> : vector<8x64xf32>
    %56 = tpu.matmul %51, %55, %cst_14 {dimension_numbers = #tpu.dot_dimension_numbers<[1], [0], [0], [1], [0, 0, 1, 1], [], []>} : vector<8x16xf32>, vector<16x64xf32>, vector<8x64xf32> -> vector<8x64xf32>
    %57 = arith.mulf %56, %9 : vector<8x64xf32>
    %cst_15 = arith.constant dense<0.000000e+00> : vector<64xf32>
    %58 = vector.multi_reduction <add>, %57, %cst_15 [0] : vector<8x64xf32> to vector<64xf32>
    %59 = vector.shape_cast %58 : vector<64xf32> to vector<1x64xf32>
    %c2 = arith.constant 2 : index
    %c0_16 = arith.constant 0 : index
    %60 = vector.load %arg9[%c2, %c0_16] : memref<8x64xf32, #tpu.memory_space<vmem>>, vector<1x64xf32>
    tpu.vector_store %arg9[%c2, %c0_16], %59 {strides = array<i32>} : memref<8x64xf32, #tpu.memory_space<vmem>>, vector<1x64xf32>,
    %c8_i32_17 = arith.constant 8 : i32
    %61 = arith.muli %arg0, %c8_i32_17 : i32
    %c3_i32 = arith.constant 3 : i32
    %62 = arith.addi %61, %c3_i32 : i32
    %63 = arith.index_cast %62 : i32 to index
    %64 = memref.load %arg1[%63] : memref<8xi32, #tpu.memory_space<smem>>
    %65 = arith.index_cast %62 : i32 to index
    %66 = memref.load %arg2[%65] : memref<8xi32, #tpu.memory_space<smem>>
    %67 = arith.index_cast %66 : i32 to index
    %c0_18 = arith.constant 0 : index
    %68 = vector.load %arg3[%67, %c0_18] : memref<16x16xf32, #tpu.memory_space<vmem>>, vector<8x16xf32>
    %69 = vector.broadcast %64 : i32 to vector<16x64xi32>
    %70 = arith.cmpi eq, %3, %69 : vector<16x64xi32>
    %71 = arith.extui %70 : vector<16x64xi1> to vector<16x64xi32>
    %72 = arith.sitofp %71 : vector<16x64xi32> to vector<16x64xf32>
    %cst_19 = arith.constant dense<0.000000e+00> : vector<8x64xf32>
    %73 = tpu.matmul %68, %72, %cst_19 {dimension_numbers = #tpu.dot_dimension_numbers<[1], [0], [0], [1], [0, 0, 1, 1], [], []>} : vector<8x16xf32>, vector<16x64xf32>, vector<8x64xf32> -> vector<8x64xf32>
    %74 = arith.mulf %73, %9 : vector<8x64xf32>
    %cst_20 = arith.constant dense<0.000000e+00> : vector<64xf32>
    %75 = vector.multi_reduction <add>, %74, %cst_20 [0] : vector<8x64xf32> to vector<64xf32>
    %76 = vector.shape_cast %75 : vector<64xf32> to vector<1x64xf32>
    %c3 = arith.constant 3 : index
    %c0_21 = arith.constant 0 : index
    %77 = vector.load %arg9[%c3, %c0_21] : memref<8x64xf32, #tpu.memory_space<vmem>>, vector<1x64xf32>
    tpu.vector_store %arg9[%c3, %c0_21], %76 {strides = array<i32>} : memref<8x64xf32, #tpu.memory_space<vmem>>, vector<1x64xf32>,
    %c8_i32_22 = arith.constant 8 : i32
    %78 = arith.muli %arg0, %c8_i32_22 : i32
    %c4_i32 = arith.constant 4 : i32
    %79 = arith.addi %78, %c4_i32 : i32
    %80 = arith.index_cast %79 : i32 to index
    %81 = memref.load %arg1[%80] : memref<8xi32, #tpu.memory_space<smem>>
    %82 = arith.index_cast %79 : i32 to index
    %83 = memref.load %arg2[%82] : memref<8xi32, #tpu.memory_space<smem>>
    %84 = arith.index_cast %83 : i32 to index
    %c0_23 = arith.constant 0 : index
    %85 = vector.load %arg3[%84, %c0_23] : memref<16x16xf32, #tpu.memory_space<vmem>>, vector<8x16xf32>
    %86 = vector.broadcast %81 : i32 to vector<16x64xi32>
    %87 = arith.cmpi eq, %3, %86 : vector<16x64xi32>
    %88 = arith.extui %87 : vector<16x64xi1> to vector<16x64xi32>
    %89 = arith.sitofp %88 : vector<16x64xi32> to vector<16x64xf32>
    %cst_24 = arith.constant dense<0.000000e+00> : vector<8x64xf32>
    %90 = tpu.matmul %85, %89, %cst_24 {dimension_numbers = #tpu.dot_dimension_numbers<[1], [0], [0], [1], [0, 0, 1, 1], [], []>} : vector<8x16xf32>, vector<16x64xf32>, vector<8x64xf32> -> vector<8x64xf32>
    %91 = arith.mulf %90, %9 : vector<8x64xf32>
    %cst_25 = arith.constant dense<0.000000e+00> : vector<64xf32>
    %92 = vector.multi_reduction <add>, %91, %cst_25 [0] : vector<8x64xf32> to vector<64xf32>
    %93 = vector.shape_cast %92 : vector<64xf32> to vector<1x64xf32>
    %c4 = arith.constant 4 : index
    %c0_26 = arith.constant 0 : index
    %94 = vector.load %arg9[%c4, %c0_26] : memref<8x64xf32, #tpu.memory_space<vmem>>, vector<1x64xf32>
    tpu.vector_store %arg9[%c4, %c0_26], %93 {strides = array<i32>} : memref<8x64xf32, #tpu.memory_space<vmem>>, vector<1x64xf32>,
    %c8_i32_27 = arith.constant 8 : i32
    %95 = arith.muli %arg0, %c8_i32_27 : i32
    %c5_i32 = arith.constant 5 : i32
    %96 = arith.addi %95, %c5_i32 : i32
    %97 = arith.index_cast %96 : i32 to index
    %98 = memref.load %arg1[%97] : memref<8xi32, #tpu.memory_space<smem>>
    %99 = arith.index_cast %96 : i32 to index
    %100 = memref.load %arg2[%99] : memref<8xi32, #tpu.memory_space<smem>>
    %101 = arith.index_cast %100 : i32 to index
    %c0_28 = arith.constant 0 : index
    %102 = vector.load %arg3[%101, %c0_28] : memref<16x16xf32, #tpu.memory_space<vmem>>, vector<8x16xf32>
    %103 = vector.broadcast %98 : i32 to vector<16x64xi32>
    %104 = arith.cmpi eq, %3, %103 : vector<16x64xi32>
    %105 = arith.extui %104 : vector<16x64xi1> to vector<16x64xi32>
    %106 = arith.sitofp %105 : vector<16x64xi32> to vector<16x64xf32>
    %cst_29 = arith.constant dense<0.000000e+00> : vector<8x64xf32>
    %107 = tpu.matmul %102, %106, %cst_29 {dimension_numbers = #tpu.dot_dimension_numbers<[1], [0], [0], [1], [0, 0, 1, 1], [], []>} : vector<8x16xf32>, vector<16x64xf32>, vector<8x64xf32> -> vector<8x64xf32>
    %108 = arith.mulf %107, %9 : vector<8x64xf32>
    %cst_30 = arith.constant dense<0.000000e+00> : vector<64xf32>
    %109 = vector.multi_reduction <add>, %108, %cst_30 [0] : vector<8x64xf32> to vector<64xf32>
    %110 = vector.shape_cast %109 : vector<64xf32> to vector<1x64xf32>
    %c5 = arith.constant 5 : index
    %c0_31 = arith.constant 0 : index
    %111 = vector.load %arg9[%c5, %c0_31] : memref<8x64xf32, #tpu.memory_space<vmem>>, vector<1x64xf32>
    tpu.vector_store %arg9[%c5, %c0_31], %110 {strides = array<i32>} : memref<8x64xf32, #tpu.memory_space<vmem>>, vector<1x64xf32>,
    %c8_i32_32 = arith.constant 8 : i32
    %112 = arith.muli %arg0, %c8_i32_32 : i32
    %c6_i32 = arith.constant 6 : i32
    %113 = arith.addi %112, %c6_i32 : i32
    %114 = arith.index_cast %113 : i32 to index
    %115 = memref.load %arg1[%114] : memref<8xi32, #tpu.memory_space<smem>>
    %116 = arith.index_cast %113 : i32 to index
    %117 = memref.load %arg2[%116] : memref<8xi32, #tpu.memory_space<smem>>
    %118 = arith.index_cast %117 : i32 to index
    %c0_33 = arith.constant 0 : index
    %119 = vector.load %arg3[%118, %c0_33] : memref<16x16xf32, #tpu.memory_space<vmem>>, vector<8x16xf32>
    %120 = vector.broadcast %115 : i32 to vector<16x64xi32>
    %121 = arith.cmpi eq, %3, %120 : vector<16x64xi32>
    %122 = arith.extui %121 : vector<16x64xi1> to vector<16x64xi32>
    %123 = arith.sitofp %122 : vector<16x64xi32> to vector<16x64xf32>
    %cst_34 = arith.constant dense<0.000000e+00> : vector<8x64xf32>
    %124 = tpu.matmul %119, %123, %cst_34 {dimension_numbers = #tpu.dot_dimension_numbers<[1], [0], [0], [1], [0, 0, 1, 1], [], []>} : vector<8x16xf32>, vector<16x64xf32>, vector<8x64xf32> -> vector<8x64xf32>
    %125 = arith.mulf %124, %9 : vector<8x64xf32>
    %cst_35 = arith.constant dense<0.000000e+00> : vector<64xf32>
    %126 = vector.multi_reduction <add>, %125, %cst_35 [0] : vector<8x64xf32> to vector<64xf32>
    %127 = vector.shape_cast %126 : vector<64xf32> to vector<1x64xf32>
    %c6 = arith.constant 6 : index
    %c0_36 = arith.constant 0 : index
    %128 = vector.load %arg9[%c6, %c0_36] : memref<8x64xf32, #tpu.memory_space<vmem>>, vector<1x64xf32>
    tpu.vector_store %arg9[%c6, %c0_36], %127 {strides = array<i32>} : memref<8x64xf32, #tpu.memory_space<vmem>>, vector<1x64xf32>,
    %c8_i32_37 = arith.constant 8 : i32
    %129 = arith.muli %arg0, %c8_i32_37 : i32
    %c7_i32 = arith.constant 7 : i32
    %130 = arith.addi %129, %c7_i32 : i32
    %131 = arith.index_cast %130 : i32 to index
    %132 = memref.load %arg1[%131] : memref<8xi32, #tpu.memory_space<smem>>
    %133 = arith.index_cast %130 : i32 to index
    %134 = memref.load %arg2[%133] : memref<8xi32, #tpu.memory_space<smem>>
    %135 = arith.index_cast %134 : i32 to index
    %c0_38 = arith.constant 0 : index
    %136 = vector.load %arg3[%135, %c0_38] : memref<16x16xf32, #tpu.memory_space<vmem>>, vector<8x16xf32>
    %137 = vector.broadcast %132 : i32 to vector<16x64xi32>
    %138 = arith.cmpi eq, %3, %137 : vector<16x64xi32>
    %139 = arith.extui %138 : vector<16x64xi1> to vector<16x64xi32>
    %140 = arith.sitofp %139 : vector<16x64xi32> to vector<16x64xf32>
    %cst_39 = arith.constant dense<0.000000e+00> : vector<8x64xf32>
    %141 = tpu.matmul %136, %140, %cst_39 {dimension_numbers = #tpu.dot_dimension_numbers<[1], [0], [0], [1], [0, 0, 1, 1], [], []>} : vector<8x16xf32>, vector<16x64xf32>, vector<8x64xf32> -> vector<8x64xf32>
    %142 = arith.mulf %141, %9 : vector<8x64xf32>
    %cst_40 = arith.constant dense<0.000000e+00> : vector<64xf32>
    %143 = vector.multi_reduction <add>, %142, %cst_40 [0] : vector<8x64xf32> to vector<64xf32>
    %144 = vector.shape_cast %143 : vector<64xf32> to vector<1x64xf32>
    %c7 = arith.constant 7 : index
    %c0_41 = arith.constant 0 : index
    %145 = vector.load %arg9[%c7, %c0_41] : memref<8x64xf32, #tpu.memory_space<vmem>>, vector<1x64xf32>
    tpu.vector_store %arg9[%c7, %c0_41], %144 {strides = array<i32>} : memref<8x64xf32, #tpu.memory_space<vmem>>, vector<1x64xf32>,
    %c0_42 = arith.constant 0 : index
    %c0_43 = arith.constant 0 : index
    %146 = vector.load %arg9[%c0_42, %c0_43] : memref<8x64xf32, #tpu.memory_space<vmem>>, vector<8x64xf32>
    %c0_44 = arith.constant 0 : index
    %c0_45 = arith.constant 0 : index
    %147 = vector.load %arg4[%c0_44, %c0_45] : memref<64x128xf32, #tpu.memory_space<vmem>>, vector<64x128xf32>
    %cst_46 = arith.constant dense<0.000000e+00> : vector<8x128xf32>
    %148 = tpu.matmul %146, %147, %cst_46 {dimension_numbers = #tpu.dot_dimension_numbers<[1], [0], [0], [1], [0, 0, 1, 1], [], []>} : vector<8x64xf32>, vector<64x128xf32>, vector<8x128xf32> -> vector<8x128xf32>
    %c0_47 = arith.constant 0 : index
    %c0_48 = arith.constant 0 : index
    %149 = vector.load %arg5[%c0_47, %c0_48] : memref<1x128xf32, #tpu.memory_space<vmem>>, vector<1x128xf32>
    %150 = vector.broadcast %149 : vector<1x128xf32> to vector<8x128xf32>
    %151 = arith.addf %148, %150 : vector<8x128xf32>
    %c0_49 = arith.constant 0 : index
    %c0_50 = arith.constant 0 : index
    %152 = vector.load %arg8[%c0_49, %c0_50] : memref<8x128xf32, #tpu.memory_space<vmem>>, vector<8x128xf32>
    tpu.vector_store %arg8[%c0_49, %c0_50], %151 {strides = array<i32>} : memref<8x128xf32, #tpu.memory_space<vmem>>, vector<8x128xf32>,
    return
  }
  func.func @transform_0(%arg0: i32, %arg1: memref<8xi32, #tpu.memory_space<smem>>, %arg2: memref<8xi32, #tpu.memory_space<smem>>) -> (i32, i32) {
    %c0_i32 = arith.constant 0 : i32
    %c0_i32_0 = arith.constant 0 : i32
    %c0_i32_1 = arith.constant 0 : i32
    return %c0_i32, %c0_i32_0 : i32, i32
  }
  func.func @transform_1(%arg0: i32, %arg1: memref<8xi32, #tpu.memory_space<smem>>, %arg2: memref<8xi32, #tpu.memory_space<smem>>) -> (i32, i32) {
    %c0_i32 = arith.constant 0 : i32
    %c0_i32_0 = arith.constant 0 : i32
    %c0_i32_1 = arith.constant 0 : i32
    return %c0_i32, %c0_i32_0 : i32, i32
  }
  func.func @transform_2(%arg0: i32, %arg1: memref<8xi32, #tpu.memory_space<smem>>, %arg2: memref<8xi32, #tpu.memory_space<smem>>) -> (i32, i32) {
    %c0_i32 = arith.constant 0 : i32
    %c0_i32_0 = arith.constant 0 : i32
    %c0_i32_1 = arith.constant 0 : i32
    return %c0_i32, %c0_i32_0 : i32, i32
  }
  func.func @transform_3(%arg0: i32, %arg1: memref<8xi32, #tpu.memory_space<smem>>, %arg2: memref<8xi32, #tpu.memory_space<smem>>) -> (i32, i32) {
    %c0_i32 = arith.constant 0 : i32
    %c0_i32_0 = arith.constant 0 : i32
    %c0_i32_1 = arith.constant 0 : i32
    return %c0_i32, %c0_i32_0 : i32, i32
  }
  func.func @transform_4(%arg0: i32, %arg1: memref<8xi32, #tpu.memory_space<smem>>, %arg2: memref<8xi32, #tpu.memory_space<smem>>) -> (i32, i32) {
    %c0_i32 = arith.constant 0 : i32
    %c0_i32_0 = arith.constant 0 : i32
    %c0_i32_1 = arith.constant 0 : i32
    return %c0_i32, %c0_i32_0 : i32, i32
  }
  func.func @transform_5(%arg0: i32, %arg1: memref<8xi32, #tpu.memory_space<smem>>, %arg2: memref<8xi32, #tpu.memory_space<smem>>) -> (i32, i32) {
    %c0_i32 = arith.constant 0 : i32
    %c0_i32_0 = arith.constant 0 : i32
    return %arg0, %c0_i32 : i32, i32
  }
}

</mosaic_0001>

<llo_original>
// kernel: tpu_custom_call.1
$region0: #{tpu_custom_call.1}
  #allocation0 [shape = 'u32[]', space=smem, size = 0x4, offset = 0x4, fixed_abs, tag = 'smem constant byte address 0x4 - core index']
  #allocation1 [shape = 'u32[144,128]{1,0:T(1,128)}', space=vmem, size = 0x12000, scoped, tag = 'internal scratch']
  #allocation2 [shape = 'f32[8,64]{1,0:T(8,128)}', space=vmem, size = 0x1000, scoped, tag = 'scratch operand']
  #allocation3 [shape = 's32[1]{0}', space=sflag, size = 0x4, scoped, tag = 'scoped memory for tpu_custom_call.1']
  #allocation4 [shape = 'u8[512]{0}', space=smem, size = 0x200, scoped, tag = 'prefetched SMEM operand 0']
  #allocation5 [shape = 'u8[512]{0}', space=smem, size = 0x200, scoped, tag = 'prefetched SMEM operand 1']
  %s0 = inlined_call_operand.hbm [shape: s32[8], index: 0, kind: input, shape index: {}]
  %s1 = inlined_call_operand.vmem [shape: s32[8], index: 1, kind: input, shape index: {}]
  %s2 = inlined_call_operand.hbm [shape: f32[16,16], index: 2, kind: input, shape index: {}]
  %s3 = inlined_call_operand.hbm [shape: f32[64,128], index: 3, kind: input, shape index: {}]
  %s4 = inlined_call_operand.vmem [shape: f32[1,128], index: 4, kind: input, shape index: {}]
  %s5 = inlined_call_operand.vmem [shape: s32[1,64], index: 5, kind: input, shape index: {}]
  %s6 = inlined_call_operand.vmem [shape: s32[1,64], index: 6, kind: input, shape index: {}]
  %s7 = inlined_call_operand.hbm [shape: f32[8,128], index: 7, kind: output, shape index: {}]
  %s8 = sld [smem:[#allocation0]]
  $region38: #{tpu_custom_call.1} parent=0
    _
  %s10 = ssub.s32 1, %s8
  %s11 = scalar_select 0, %s10, %s8
  %13 = dma.hbm_to_smem %s0, 16, [#allocation4], [#allocation3]
  %s14 = sshll.u32 %s1, 4
  %s15 = int_to_ptr.vmem [resolvable:$true] %s14
  %17 = dma.vmem_to_smem %s15, 16, [#allocation5], [#allocation3]
  %18 = dma.done [#allocation3], 32
  %19 = sfence
  $region1: #{tpu_custom_call.1} parent=0
    #allocation6 [shape = 'u8[8192]{0}', space=vmem, size = 0x2000, scoped, tag = 'input window, operand 2, single buffered']
    #allocation7 [shape = 's32[1]{0}', space=sflag, size = 0x4, scoped, tag = 'scoped memory for tpu_custom_call.1']
    #allocation8 [shape = 's32[1]{0}', space=sflag, size = 0x4, scoped, tag = 'scoped memory for tpu_custom_call.1']
    #allocation9 [shape = 'u8[32768]{0}', space=vmem, size = 0x8000, scoped, tag = 'input window, operand 3, single buffered']
    #allocation10 [shape = 's32[1]{0}', space=sflag, size = 0x4, scoped, tag = 'scoped memory for tpu_custom_call.1']
    #allocation11 [shape = 'u8[4096]{0}', space=vmem, size = 0x1000, scoped, tag = 'output window, operand 0, single buffered']
    %20 = vsyncpa [#allocation7], 0
    %21 = vsyncpa [#allocation10], 0
    %22 = vsyncpa [#allocation8], 0
    // Predicated region
    $region2: #{tpu_custom_call.1} parent=1 // pred_check
      _
    $region3: #{tpu_custom_call.1} parent=1 // pred_check_branch
      %24 = sbr.rel (0) target = $region5
    $region4: #{tpu_custom_call.1} parent=1 // pred_region
      %s26 = ssub.s32 256, 256
      %27 = vsyncadd [#allocation7], %s26
      %s28 = sshll.u32 [#allocation6], 4
      %s29 = int_to_ptr.vmem [resolvable:$true] %s28
      %34 = dma.hbm_to_vmem [thread:$0]  %s2, 256, %s29, [#allocation7], 128, 128, 8
    $region5: #{tpu_custom_call.1} parent=1 // pred_fallthru
      _
    // Predicated region
    $region6: #{tpu_custom_call.1} parent=1 // pred_check
      _
    $region7: #{tpu_custom_call.1} parent=1 // pred_check_branch
      %36 = sbr.rel (0) target = $region9
    $region8: #{tpu_custom_call.1} parent=1 // pred_region
      %s38 = ssub.s32 1024, 1024
      %39 = vsyncadd [#allocation10], %s38
      %s40 = sshll.u32 [#allocation9], 4
      %s41 = int_to_ptr.vmem [resolvable:$true] %s40
      %46 = dma.hbm_to_vmem [thread:$0]  %s3, 1024, %s41, [#allocation10], 128, 128, 8
    $region9: #{tpu_custom_call.1} parent=1 // pred_fallthru
      _
    // Predicated region
    $region10: #{tpu_custom_call.1} parent=1 // pred_check
      _
    $region11: #{tpu_custom_call.1} parent=1 // pred_check_branch
      %48 = sbr.rel (0) target = $region13
    $region12: #{tpu_custom_call.1} parent=1 // pred_region
      _
    $region13: #{tpu_custom_call.1} parent=1 // pred_fallthru
      _
    // Predicated region
    $region14: #{tpu_custom_call.1} parent=1 // pred_check
      _
    $region15: #{tpu_custom_call.1} parent=1 // pred_check_branch
      %50 = sbr.rel (0) target = $region17
    $region16: #{tpu_custom_call.1} parent=1 // pred_region
      _
    $region17: #{tpu_custom_call.1} parent=1 // pred_fallthru
      _
    // Predicated region
    $region18: #{tpu_custom_call.1} parent=1 // pred_check
      _
    $region19: #{tpu_custom_call.1} parent=1 // pred_check_branch
      %52 = sbr.rel (0) target = $region21
    $region20: #{tpu_custom_call.1} parent=1 // pred_region
      _
    $region21: #{tpu_custom_call.1} parent=1 // pred_fallthru
      _
    // Predicated region
    $region22: #{tpu_custom_call.1} parent=1 // pred_check
      _
    $region23: #{tpu_custom_call.1} parent=1 // pred_check_branch
      %54 = sbr.rel (0) target = $region25
    $region24: #{tpu_custom_call.1} parent=1 // pred_region
      %55 = dma.done [#allocation7], 256
    $region25: #{tpu_custom_call.1} parent=1 // pred_fallthru
      _
    // Predicated region
    $region26: #{tpu_custom_call.1} parent=1 // pred_check
      _
    $region27: #{tpu_custom_call.1} parent=1 // pred_check_branch
      %57 = sbr.rel (0) target = $region29
    $region28: #{tpu_custom_call.1} parent=1 // pred_region
      %58 = dma.done [#allocation10], 1024
    $region29: #{tpu_custom_call.1} parent=1 // pred_fallthru
      _
    %v59 = vlaneseq
    %v60 = vshrl.u32 %v59, 7
    %v61 = vadd.s32 %v60, 8
    %v62 = vld [vmem:[%s5] sm:$0x1]
    %v63 = vlaneseq
    %v64 = vshrl.u32 %v63, 7
    %v65 = vsub.s32 0, %v64
    %v66 = vrot.slane %v62, %v65
    %v67 = vsub.s32 %v60, %v66
    %v68 = vsub.s32 %v61, %v66
    %v69 = vld [vmem:[%s6] sm:$0x1]
    %v70 = vlaneseq
    %v71 = vshrl.u32 %v70, 7
    %v72 = vsub.s32 0, %v71
    %v73 = vrot.slane %v69, %v72
    %vm74 = vcmp.eq.s32.totalorder %v60, %v73
    %v75 = vsel %vm74, 1, 0
    %v76 = vcvt.s32.f32 %v75
    %s77 = smul.u32 0, 8
    %s78 = sld [smem:[#allocation4 + %s77]]
    %s79 = sld [smem:[#allocation5 + %s77]]
    %s80 = scalar_lea.vmem [#allocation6], %s79
    %v81 = vld [vmem:[%s80] sm:$0xff]
    %v82 = vstv %s78
    %vm83 = vcmp.eq.s32.totalorder %v67, %v82
    %vm84 = vcmp.eq.s32.totalorder %v68, %v82
    %v85 = vsel %vm83, 1, 0
    %v86 = vsel %vm84, 1, 0
    %v87 = vcvt.s32.f32 %v85
    %v88 = vcvt.s32.f32 %v86
    %vm89 = vcmask 130048
    %v91 = vsel %vm89, %v81, 0
    %93 = vmatprep.subr.mxu0 0.0
    %94 = vmatpush1.msra.mxu0 %v87
    %95 = vmatprep.subr.mxu0 0.0
    %96 = vmatpush1.msra.mxu0 %v88
    %97 = vmatprep.subr.mxu0 0.0
    %98 = vmatpush1.msra.mxu0 0.0
    %99 = vmatprep.subr.mxu0 0.0
    %100 = vmatpush1.msra.mxu0 0.0
    %101 = vmatprep.subr.mxu0 0.0
    %102 = vmatpush1.msra.mxu0 0.0
    %103 = vmatprep.subr.mxu0 0.0
    %104 = vmatpush1.msra.mxu0 0.0
    %105 = vmatprep.subr.mxu0 0.0
    %106 = vmatpush1.msra.mxu0 0.0
    %107 = vmatprep.subr.mxu0 0.0
    %108 = vmatpush1.msra.mxu0 0.0
    %109 = vmatprep.subr.mxu0 0.0
    %110 = vmatpush1.msra.mxu0 0.0
    %111 = vmatprep.subr.mxu0 0.0
    %112 = vmatpush1.msra.mxu0 0.0
    %113 = vmatprep.subr.mxu0 0.0
    %114 = vmatpush1.msra.mxu0 0.0
    %115 = vmatprep.subr.mxu0 0.0
    %116 = vmatpush1.msra.mxu0 0.0
    %117 = vmatprep.subr.mxu0 0.0
    %118 = vmatpush1.msra.mxu0 0.0
    %119 = vmatprep.subr.mxu0 0.0
    %120 = vmatpush1.msra.mxu0 0.0
    %121 = vmatprep.subr.mxu0 0.0
    %122 = vmatpush1.msra.mxu0 0.0
    %123 = vmatprep.subr.mxu0 0.0
    %124 = vmatpush1.msra.mxu0 0.0
    %125 = vmatprep.subr.mxu0 0.0
    %126 = vmatpush1.msra.mxu0 0.0
    %127 = vmatprep.subr.mxu0 0.0
    %128 = vmatpush1.msra.mxu0 0.0
    %129 = vmatprep.subr.mxu0 0.0
    %130 = vmatpush1.msra.mxu0 0.0
    %131 = vmatprep.subr.mxu0 0.0
    %132 = vmatpush1.msra.mxu0 0.0
    %133 = vmatprep.subr.mxu0 0.0
    %134 = vmatpush1.msra.mxu0 0.0
    %135 = vmatprep.subr.mxu0 0.0
    %136 = vmatpush1.msra.mxu0 0.0
    %137 = vmatprep.subr.mxu0 0.0
    %138 = vmatpush1.msra.mxu0 0.0
    %139 = vmatprep.subr.mxu0 0.0
    %140 = vmatpush1.msra.mxu0 0.0
    %141 = vmatprep.subr.mxu0 0.0
    %142 = vmatpush1.msra.mxu0 0.0
    %143 = vmatprep.subr.mxu0 0.0
    %144 = vmatpush1.msra.mxu0 0.0
    %145 = vmatprep.subr.mxu0 0.0
    %146 = vmatpush1.msra.mxu0 0.0
    %147 = vmatprep.subr.mxu0 0.0
    %148 = vmatpush1.msra.mxu0 0.0
    %149 = vmatprep.subr.mxu0 0.0
    %150 = vmatpush1.msra.mxu0 0.0
    %151 = vmatprep.subr.mxu0 0.0
    %152 = vmatpush1.msra.mxu0 0.0
    %153 = vmatprep.subr.mxu0 0.0
    %154 = vmatpush1.msra.mxu0 0.0
    %155 = vmatprep.subr.mxu0 0.0
    %156 = vmatpush1.msra.mxu0 0.0
    %157 = vmatprep.mubr.f32.mxu0 0.0
    %158 = vmatmul.mubr.f32.gmra.mrb[0].mxu0 %v91
    %v159 = vpop.f32.mrb[0].mxu0
    %v160 = vadd.f32 0.0, %v159
    %v161 = vpop.f32.mrb[0].mxu0
    %162 = vdwg.mxu0
    %v163 = vmul.f32 %v160, %v76
    %vm164 = vcmask 523264
    %v165 = vsel %vm164, %v163, 0.0
    %v166 = vrot.slane %v165, 4
    %v167 = vadd.f32 %v165, %v166
    %v168 = vrot.slane %v167, 2
    %v169 = vadd.f32 %v167, %v168
    %v170 = vrot.slane %v169, 1
    %v171 = vadd.f32 %v169, %v170
    %vm172 = vcmask 516096
    %173 = vst.msk [vmem:[#allocation2] sm:$0x1] %vm172, %v171
    %s174 = sadd.s32 %s77, 1
    %s175 = sld [smem:[#allocation4 + %s174]]
    %s176 = sld [smem:[#allocation5 + %s174]]
    %s177 = scalar_lea.vmem [#allocation6], %s176
    %v178 = vld [vmem:[%s177] sm:$0xff]
    %v179 = vstv %s175
    %vm180 = vcmp.eq.s32.totalorder %v67, %v179
    %vm181 = vcmp.eq.s32.totalorder %v68, %v179
    %v182 = vsel %vm180, 1, 0
    %v183 = vsel %vm181, 1, 0
    %v184 = vcvt.s32.f32 %v182
    %v185 = vcvt.s32.f32 %v183
    %v187 = vsel %vm89, %v178, 0
    %189 = vmatprep.subr.mxu0 0.0
    %190 = vmatpush1.msra.mxu0 %v184
    %191 = vmatprep.subr.mxu0 0.0
    %192 = vmatpush1.msra.mxu0 %v185
    %193 = vmatprep.subr.mxu0 0.0
    %194 = vmatpush1.msra.mxu0 0.0
    %195 = vmatprep.subr.mxu0 0.0
    %196 = vmatpush1.msra.mxu0 0.0
    %197 = vmatprep.subr.mxu0 0.0
    %198 = vmatpush1.msra.mxu0 0.0
    %199 = vmatprep.subr.mxu0 0.0
    %200 = vmatpush1.msra.mxu0 0.0
    %201 = vmatprep.subr.mxu0 0.0
    %202 = vmatpush1.msra.mxu0 0.0
    %203 = vmatprep.subr.mxu0 0.0
    %204 = vmatpush1.msra.mxu0 0.0
    %205 = vmatprep.subr.mxu0 0.0
    %206 = vmatpush1.msra.mxu0 0.0
    %207 = vmatprep.subr.mxu0 0.0
    %208 = vmatpush1.msra.mxu0 0.0
    %209 = vmatprep.subr.mxu0 0.0
    %210 = vmatpush1.msra.mxu0 0.0
    %211 = vmatprep.subr.mxu0 0.0
    %212 = vmatpush1.msra.mxu0 0.0
    %213 = vmatprep.subr.mxu0 0.0
    %214 = vmatpush1.msra.mxu0 0.0
    %215 = vmatprep.subr.mxu0 0.0
    %216 = vmatpush1.msra.mxu0 0.0
    %217 = vmatprep.subr.mxu0 0.0
    %218 = vmatpush1.msra.mxu0 0.0
    %219 = vmatprep.subr.mxu0 0.0
    %220 = vmatpush1.msra.mxu0 0.0
    %221 = vmatprep.subr.mxu0 0.0
    %222 = vmatpush1.msra.mxu0 0.0
    %223 = vmatprep.subr.mxu0 0.0
    %224 = vmatpush1.msra.mxu0 0.0
    %225 = vmatprep.subr.mxu0 0.0
    %226 = vmatpush1.msra.mxu0 0.0
    %227 = vmatprep.subr.mxu0 0.0
    %228 = vmatpush1.msra.mxu0 0.0
    %229 = vmatprep.subr.mxu0 0.0
    %230 = vmatpush1.msra.mxu0 0.0
    %231 = vmatprep.subr.mxu0 0.0
    %232 = vmatpush1.msra.mxu0 0.0
    %233 = vmatprep.subr.mxu0 0.0
    %234 = vmatpush1.msra.mxu0 0.0
    %235 = vmatprep.subr.mxu0 0.0
    %236 = vmatpush1.msra.mxu0 0.0
    %237 = vmatprep.subr.mxu0 0.0
    %238 = vmatpush1.msra.mxu0 0.0
    %239 = vmatprep.subr.mxu0 0.0
    %240 = vmatpush1.msra.mxu0 0.0
    %241 = vmatprep.subr.mxu0 0.0
    %242 = vmatpush1.msra.mxu0 0.0
    %243 = vmatprep.subr.mxu0 0.0
    %244 = vmatpush1.msra.mxu0 0.0
    %245 = vmatprep.subr.mxu0 0.0
    %246 = vmatpush1.msra.mxu0 0.0
    %247 = vmatprep.subr.mxu0 0.0
    %248 = vmatpush1.msra.mxu0 0.0
    %249 = vmatprep.subr.mxu0 0.0
    %250 = vmatpush1.msra.mxu0 0.0
    %251 = vmatprep.subr.mxu0 0.0
    %252 = vmatpush1.msra.mxu0 0.0
    %253 = vmatprep.mubr.f32.mxu0 0.0
    %254 = vmatmul.mubr.f32.gmra.mrb[0].mxu0 %v187
    %v255 = vpop.f32.mrb[0].mxu0
    %v256 = vadd.f32 0.0, %v255
    %v257 = vpop.f32.mrb[0].mxu0
    %258 = vdwg.mxu0
    %v259 = vmul.f32 %v256, %v76
    %v260 = vsel %vm164, %v259, 0.0
    %v261 = vrot.slane %v260, 4
    %v262 = vadd.f32 %v260, %v261
    %v263 = vrot.slane %v262, 2
    %v264 = vadd.f32 %v262, %v263
    %v265 = vrot.slane %v264, 1
    %v266 = vadd.f32 %v264, %v265
    %267 = vst.msk [vmem:[#allocation2 + $0x1] sm:$0x1] %vm172, %v266
    %s268 = sadd.s32 %s77, 2
    %s269 = sld [smem:[#allocation4 + %s268]]
    %s270 = sld [smem:[#allocation5 + %s268]]
    %s271 = scalar_lea.vmem [#allocation6], %s270
    %v272 = vld [vmem:[%s271] sm:$0xff]
    %v273 = vstv %s269
    %vm274 = vcmp.eq.s32.totalorder %v67, %v273
    %vm275 = vcmp.eq.s32.totalorder %v68, %v273
    %v276 = vsel %vm274, 1, 0
    %v277 = vsel %vm275, 1, 0
    %v278 = vcvt.s32.f32 %v276
    %v279 = vcvt.s32.f32 %v277
    %v281 = vsel %vm89, %v272, 0
    %283 = vmatprep.subr.mxu0 0.0
    %284 = vmatpush1.msra.mxu0 %v278
    %285 = vmatprep.subr.mxu0 0.0
    %286 = vmatpush1.msra.mxu0 %v279
    %287 = vmatprep.subr.mxu0 0.0
    %288 = vmatpush1.msra.mxu0 0.0
    %289 = vmatprep.subr.mxu0 0.0
    %290 = vmatpush1.msra.mxu0 0.0
    %291 = vmatprep.subr.mxu0 0.0
    %292 = vmatpush1.msra.mxu0 0.0
    %293 = vmatprep.subr.mxu0 0.0
    %294 = vmatpush1.msra.mxu0 0.0
    %295 = vmatprep.subr.mxu0 0.0
    %296 = vmatpush1.msra.mxu0 0.0
    %297 = vmatprep.subr.mxu0 0.0
    %298 = vmatpush1.msra.mxu0 0.0
    %299 = vmatprep.subr.mxu0 0.0
    %300 = vmatpush1.msra.mxu0 0.0
    %301 = vmatprep.subr.mxu0 0.0
    %302 = vmatpush1.msra.mxu0 0.0
    %303 = vmatprep.subr.mxu0 0.0
    %304 = vmatpush1.msra.mxu0 0.0
    %305 = vmatprep.subr.mxu0 0.0
    %306 = vmatpush1.msra.mxu0 0.0
    %307 = vmatprep.subr.mxu0 0.0
    %308 = vmatpush1.msra.mxu0 0.0
    %309 = vmatprep.subr.mxu0 0.0
    %310 = vmatpush1.msra.mxu0 0.0
    %311 = vmatprep.subr.mxu0 0.0
    %312 = vmatpush1.msra.mxu0 0.0
    %313 = vmatprep.subr.mxu0 0.0
    %314 = vmatpush1.msra.mxu0 0.0
    %315 = vmatprep.subr.mxu0 0.0
    %316 = vmatpush1.msra.mxu0 0.0
    %317 = vmatprep.subr.mxu0 0.0
    %318 = vmatpush1.msra.mxu0 0.0
    %319 = vmatprep.subr.mxu0 0.0
    %320 = vmatpush1.msra.mxu0 0.0
    %321 = vmatprep.subr.mxu0 0.0
    %322 = vmatpush1.msra.mxu0 0.0
    %323 = vmatprep.subr.mxu0 0.0
    %324 = vmatpush1.msra.mxu0 0.0
    %325 = vmatprep.subr.mxu0 0.0
    %326 = vmatpush1.msra.mxu0 0.0
    %327 = vmatprep.subr.mxu0 0.0
    %328 = vmatpush1.msra.mxu0 0.0
    %329 = vmatprep.subr.mxu0 0.0
    %330 = vmatpush1.msra.mxu0 0.0
    %331 = vmatprep.subr.mxu0 0.0
    %332 = vmatpush1.msra.mxu0 0.0
    %333 = vmatprep.subr.mxu0 0.0
    %334 = vmatpush1.msra.mxu0 0.0
    %335 = vmatprep.subr.mxu0 0.0
    %336 = vmatpush1.msra.mxu0 0.0
    %337 = vmatprep.subr.mxu0 0.0
    %338 = vmatpush1.msra.mxu0 0.0
    %339 = vmatprep.subr.mxu0 0.0
    %340 = vmatpush1.msra.mxu0 0.0
    %341 = vmatprep.subr.mxu0 0.0
    %342 = vmatpush1.msra.mxu0 0.0
    %343 = vmatprep.subr.mxu0 0.0
    %344 = vmatpush1.msra.mxu0 0.0
    %345 = vmatprep.subr.mxu0 0.0
    %346 = vmatpush1.msra.mxu0 0.0
    %347 = vmatprep.mubr.f32.mxu0 0.0
    %348 = vmatmul.mubr.f32.gmra.mrb[0].mxu0 %v281
    %v349 = vpop.f32.mrb[0].mxu0
    %v350 = vadd.f32 0.0, %v349
    %v351 = vpop.f32.mrb[0].mxu0
    %352 = vdwg.mxu0
    %v353 = vmul.f32 %v350, %v76
    %v354 = vsel %vm164, %v353, 0.0
    %v355 = vrot.slane %v354, 4
    %v356 = vadd.f32 %v354, %v355
    %v357 = vrot.slane %v356, 2
    %v358 = vadd.f32 %v356, %v357
    %v359 = vrot.slane %v358, 1
    %v360 = vadd.f32 %v358, %v359
    %361 = vst.msk [vmem:[#allocation2 + $0x2] sm:$0x1] %vm172, %v360
    %s362 = sadd.s32 %s77, 3
    %s363 = sld [smem:[#allocation4 + %s362]]
    %s364 = sld [smem:[#allocation5 + %s362]]
    %s365 = scalar_lea.vmem [#allocation6], %s364
    %v366 = vld [vmem:[%s365] sm:$0xff]
    %v367 = vstv %s363
    %vm368 = vcmp.eq.s32.totalorder %v67, %v367
    %vm369 = vcmp.eq.s32.totalorder %v68, %v367
    %v370 = vsel %vm368, 1, 0
    %v371 = vsel %vm369, 1, 0
    %v372 = vcvt.s32.f32 %v370
    %v373 = vcvt.s32.f32 %v371
    %v375 = vsel %vm89, %v366, 0
    %377 = vmatprep.subr.mxu0 0.0
    %378 = vmatpush1.msra.mxu0 %v372
    %379 = vmatprep.subr.mxu0 0.0
    %380 = vmatpush1.msra.mxu0 %v373
    %381 = vmatprep.subr.mxu0 0.0
    %382 = vmatpush1.msra.mxu0 0.0
    %383 = vmatprep.subr.mxu0 0.0
    %384 = vmatpush1.msra.mxu0 0.0
    %385 = vmatprep.subr.mxu0 0.0
    %386 = vmatpush1.msra.mxu0 0.0
    %387 = vmatprep.subr.mxu0 0.0
    %388 = vmatpush1.msra.mxu0 0.0
    %389 = vmatprep.subr.mxu0 0.0
    %390 = vmatpush1.msra.mxu0 0.0
    %391 = vmatprep.subr.mxu0 0.0
    %392 = vmatpush1.msra.mxu0 0.0
    %393 = vmatprep.subr.mxu0 0.0
    %394 = vmatpush1.msra.mxu0 0.0
    %395 = vmatprep.subr.mxu0 0.0
    %396 = vmatpush1.msra.mxu0 0.0
    %397 = vmatprep.subr.mxu0 0.0
    %398 = vmatpush1.msra.mxu0 0.0
    %399 = vmatprep.subr.mxu0 0.0
    %400 = vmatpush1.msra.mxu0 0.0
    %401 = vmatprep.subr.mxu0 0.0
    %402 = vmatpush1.msra.mxu0 0.0
    %403 = vmatprep.subr.mxu0 0.0
    %404 = vmatpush1.msra.mxu0 0.0
    %405 = vmatprep.subr.mxu0 0.0
    %406 = vmatpush1.msra.mxu0 0.0
    %407 = vmatprep.subr.mxu0 0.0
    %408 = vmatpush1.msra.mxu0 0.0
    %409 = vmatprep.subr.mxu0 0.0
    %410 = vmatpush1.msra.mxu0 0.0
    %411 = vmatprep.subr.mxu0 0.0
    %412 = vmatpush1.msra.mxu0 0.0
    %413 = vmatprep.subr.mxu0 0.0
    %414 = vmatpush1.msra.mxu0 0.0
    %415 = vmatprep.subr.mxu0 0.0
    %416 = vmatpush1.msra.mxu0 0.0
    %417 = vmatprep.subr.mxu0 0.0
    %418 = vmatpush1.msra.mxu0 0.0
    %419 = vmatprep.subr.mxu0 0.0
    %420 = vmatpush1.msra.mxu0 0.0
    %421 = vmatprep.subr.mxu0 0.0
    %422 = vmatpush1.msra.mxu0 0.0
    %423 = vmatprep.subr.mxu0 0.0
    %424 = vmatpush1.msra.mxu0 0.0
    %425 = vmatprep.subr.mxu0 0.0
    %426 = vmatpush1.msra.mxu0 0.0
    %427 = vmatprep.subr.mxu0 0.0
    %428 = vmatpush1.msra.mxu0 0.0
    %429 = vmatprep.subr.mxu0 0.0
    %430 = vmatpush1.msra.mxu0 0.0
    %431 = vmatprep.subr.mxu0 0.0
    %432 = vmatpush1.msra.mxu0 0.0
    %433 = vmatprep.subr.mxu0 0.0
    %434 = vmatpush1.msra.mxu0 0.0
    %435 = vmatprep.subr.mxu0 0.0
    %436 = vmatpush1.msra.mxu0 0.0
    %437 = vmatprep.subr.mxu0 0.0
    %438 = vmatpush1.msra.mxu0 0.0
    %439 = vmatprep.subr.mxu0 0.0
    %440 = vmatpush1.msra.mxu0 0.0
    %441 = vmatprep.mubr.f32.mxu0 0.0
    %442 = vmatmul.mubr.f32.gmra.mrb[0].mxu0 %v375
    %v443 = vpop.f32.mrb[0].mxu0
    %v444 = vadd.f32 0.0, %v443
    %v445 = vpop.f32.mrb[0].mxu0
    %446 = vdwg.mxu0
    %v447 = vmul.f32 %v444, %v76
    %v448 = vsel %vm164, %v447, 0.0
    %v449 = vrot.slane %v448, 4
    %v450 = vadd.f32 %v448, %v449
    %v451 = vrot.slane %v450, 2
    %v452 = vadd.f32 %v450, %v451
    %v453 = vrot.slane %v452, 1
    %v454 = vadd.f32 %v452, %v453
    %455 = vst.msk [vmem:[#allocation2 + $0x3] sm:$0x1] %vm172, %v454
    %s456 = sadd.s32 %s77, 4
    %s457 = sld [smem:[#allocation4 + %s456]]
    %s458 = sld [smem:[#allocation5 + %s456]]
    %s459 = scalar_lea.vmem [#allocation6], %s458
    %v460 = vld [vmem:[%s459] sm:$0xff]
    %v461 = vstv %s457
    %vm462 = vcmp.eq.s32.totalorder %v67, %v461
    %vm463 = vcmp.eq.s32.totalorder %v68, %v461
    %v464 = vsel %vm462, 1, 0
    %v465 = vsel %vm463, 1, 0
    %v466 = vcvt.s32.f32 %v464
    %v467 = vcvt.s32.f32 %v465
    %v469 = vsel %vm89, %v460, 0
    %471 = vmatprep.subr.mxu0 0.0
    %472 = vmatpush1.msra.mxu0 %v466
    %473 = vmatprep.subr.mxu0 0.0
    %474 = vmatpush1.msra.mxu0 %v467
    %475 = vmatprep.subr.mxu0 0.0
    %476 = vmatpush1.msra.mxu0 0.0
    %477 = vmatprep.subr.mxu0 0.0
    %478 = vmatpush1.msra.mxu0 0.0
    %479 = vmatprep.subr.mxu0 0.0
    %480 = vmatpush1.msra.mxu0 0.0
    %481 = vmatprep.subr.mxu0 0.0
    %482 = vmatpush1.msra.mxu0 0.0
    %483 = vmatprep.subr.mxu0 0.0
    %484 = vmatpush1.msra.mxu0 0.0
    %485 = vmatprep.subr.mxu0 0.0
    %486 = vmatpush1.msra.mxu0 0.0
    %487 = vmatprep.subr.mxu0 0.0
    %488 = vmatpush1.msra.mxu0 0.0
    %489 = vmatprep.subr.mxu0 0.0
    %490 = vmatpush1.msra.mxu0 0.0
    %491 = vmatprep.subr.mxu0 0.0
    %492 = vmatpush1.msra.mxu0 0.0
    %493 = vmatprep.subr.mxu0 0.0
    %494 = vmatpush1.msra.mxu0 0.0
    %495 = vmatprep.subr.mxu0 0.0
    %496 = vmatpush1.msra.mxu0 0.0
    %497 = vmatprep.subr.mxu0 0.0
    %498 = vmatpush1.msra.mxu0 0.0
    %499 = vmatprep.subr.mxu0 0.0
    %500 = vmatpush1.msra.mxu0 0.0
    %501 = vmatprep.subr.mxu0 0.0
    %502 = vmatpush1.msra.mxu0 0.0
    %503 = vmatprep.subr.mxu0 0.0
    %504 = vmatpush1.msra.mxu0 0.0
    %505 = vmatprep.subr.mxu0 0.0
    %506 = vmatpush1.msra.mxu0 0.0
    %507 = vmatprep.subr.mxu0 0.0
    %508 = vmatpush1.msra.mxu0 0.0
    %509 = vmatprep.subr.mxu0 0.0
    %510 = vmatpush1.msra.mxu0 0.0
    %511 = vmatprep.subr.mxu0 0.0
    %512 = vmatpush1.msra.mxu0 0.0
    %513 = vmatprep.subr.mxu0 0.0
    %514 = vmatpush1.msra.mxu0 0.0
    %515 = vmatprep.subr.mxu0 0.0
    %516 = vmatpush1.msra.mxu0 0.0
    %517 = vmatprep.subr.mxu0 0.0
    %518 = vmatpush1.msra.mxu0 0.0
    %519 = vmatprep.subr.mxu0 0.0
    %520 = vmatpush1.msra.mxu0 0.0
    %521 = vmatprep.subr.mxu0 0.0
    %522 = vmatpush1.msra.mxu0 0.0
    %523 = vmatprep.subr.mxu0 0.0
    %524 = vmatpush1.msra.mxu0 0.0
    %525 = vmatprep.subr.mxu0 0.0
    %526 = vmatpush1.msra.mxu0 0.0
    %527 = vmatprep.subr.mxu0 0.0
    %528 = vmatpush1.msra.mxu0 0.0
    %529 = vmatprep.subr.mxu0 0.0
    %530 = vmatpush1.msra.mxu0 0.0
    %531 = vmatprep.subr.mxu0 0.0
    %532 = vmatpush1.msra.mxu0 0.0
    %533 = vmatprep.subr.mxu0 0.0
    %534 = vmatpush1.msra.mxu0 0.0
    %535 = vmatprep.mubr.f32.mxu0 0.0
    %536 = vmatmul.mubr.f32.gmra.mrb[0].mxu0 %v469
    %v537 = vpop.f32.mrb[0].mxu0
    %v538 = vadd.f32 0.0, %v537
    %v539 = vpop.f32.mrb[0].mxu0
    %540 = vdwg.mxu0
    %v541 = vmul.f32 %v538, %v76
    %v542 = vsel %vm164, %v541, 0.0
    %v543 = vrot.slane %v542, 4
    %v544 = vadd.f32 %v542, %v543
    %v545 = vrot.slane %v544, 2
    %v546 = vadd.f32 %v544, %v545
    %v547 = vrot.slane %v546, 1
    %v548 = vadd.f32 %v546, %v547
    %549 = vst.msk [vmem:[#allocation2 + $0x4] sm:$0x1] %vm172, %v548
    %s550 = sadd.s32 %s77, 5
    %s551 = sld [smem:[#allocation4 + %s550]]
    %s552 = sld [smem:[#allocation5 + %s550]]
    %s553 = scalar_lea.vmem [#allocation6], %s552
    %v554 = vld [vmem:[%s553] sm:$0xff]
    %v555 = vstv %s551
    %vm556 = vcmp.eq.s32.totalorder %v67, %v555
    %vm557 = vcmp.eq.s32.totalorder %v68, %v555
    %v558 = vsel %vm556, 1, 0
    %v559 = vsel %vm557, 1, 0
    %v560 = vcvt.s32.f32 %v558
    %v561 = vcvt.s32.f32 %v559
    %v563 = vsel %vm89, %v554, 0
    %565 = vmatprep.subr.mxu0 0.0
    %566 = vmatpush1.msra.mxu0 %v560
    %567 = vmatprep.subr.mxu0 0.0
    %568 = vmatpush1.msra.mxu0 %v561
    %569 = vmatprep.subr.mxu0 0.0
    %570 = vmatpush1.msra.mxu0 0.0
    %571 = vmatprep.subr.mxu0 0.0
    %572 = vmatpush1.msra.mxu0 0.0
    %573 = vmatprep.subr.mxu0 0.0
    %574 = vmatpush1.msra.mxu0 0.0
    %575 = vmatprep.subr.mxu0 0.0
    %576 = vmatpush1.msra.mxu0 0.0
    %577 = vmatprep.subr.mxu0 0.0
    %578 = vmatpush1.msra.mxu0 0.0
    %579 = vmatprep.subr.mxu0 0.0
    %580 = vmatpush1.msra.mxu0 0.0
    %581 = vmatprep.subr.mxu0 0.0
    %582 = vmatpush1.msra.mxu0 0.0
    %583 = vmatprep.subr.mxu0 0.0
    %584 = vmatpush1.msra.mxu0 0.0
    %585 = vmatprep.subr.mxu0 0.0
    %586 = vmatpush1.msra.mxu0 0.0
    %587 = vmatprep.subr.mxu0 0.0
    %588 = vmatpush1.msra.mxu0 0.0
    %589 = vmatprep.subr.mxu0 0.0
    %590 = vmatpush1.msra.mxu0 0.0
    %591 = vmatprep.subr.mxu0 0.0
    %592 = vmatpush1.msra.mxu0 0.0
    %593 = vmatprep.subr.mxu0 0.0
    %594 = vmatpush1.msra.mxu0 0.0
    %595 = vmatprep.subr.mxu0 0.0
    %596 = vmatpush1.msra.mxu0 0.0
    %597 = vmatprep.subr.mxu0 0.0
    %598 = vmatpush1.msra.mxu0 0.0
    %599 = vmatprep.subr.mxu0 0.0
    %600 = vmatpush1.msra.mxu0 0.0
    %601 = vmatprep.subr.mxu0 0.0
    %602 = vmatpush1.msra.mxu0 0.0
    %603 = vmatprep.subr.mxu0 0.0
    %604 = vmatpush1.msra.mxu0 0.0
    %605 = vmatprep.subr.mxu0 0.0
    %606 = vmatpush1.msra.mxu0 0.0
    %607 = vmatprep.subr.mxu0 0.0
    %608 = vmatpush1.msra.mxu0 0.0
    %609 = vmatprep.subr.mxu0 0.0
    %610 = vmatpush1.msra.mxu0 0.0
    %611 = vmatprep.subr.mxu0 0.0
    %612 = vmatpush1.msra.mxu0 0.0
    %613 = vmatprep.subr.mxu0 0.0
    %614 = vmatpush1.msra.mxu0 0.0
    %615 = vmatprep.subr.mxu0 0.0
    %616 = vmatpush1.msra.mxu0 0.0
    %617 = vmatprep.subr.mxu0 0.0
    %618 = vmatpush1.msra.mxu0 0.0
    %619 = vmatprep.subr.mxu0 0.0
    %620 = vmatpush1.msra.mxu0 0.0
    %621 = vmatprep.subr.mxu0 0.0
    %622 = vmatpush1.msra.mxu0 0.0
    %623 = vmatprep.subr.mxu0 0.0
    %624 = vmatpush1.msra.mxu0 0.0
    %625 = vmatprep.subr.mxu0 0.0
    %626 = vmatpush1.msra.mxu0 0.0
    %627 = vmatprep.subr.mxu0 0.0
    %628 = vmatpush1.msra.mxu0 0.0
    %629 = vmatprep.mubr.f32.mxu0 0.0
    %630 = vmatmul.mubr.f32.gmra.mrb[0].mxu0 %v563
    %v631 = vpop.f32.mrb[0].mxu0
    %v632 = vadd.f32 0.0, %v631
    %v633 = vpop.f32.mrb[0].mxu0
    %634 = vdwg.mxu0
    %v635 = vmul.f32 %v632, %v76
    %v636 = vsel %vm164, %v635, 0.0
    %v637 = vrot.slane %v636, 4
    %v638 = vadd.f32 %v636, %v637
    %v639 = vrot.slane %v638, 2
    %v640 = vadd.f32 %v638, %v639
    %v641 = vrot.slane %v640, 1
    %v642 = vadd.f32 %v640, %v641
    %643 = vst.msk [vmem:[#allocation2 + $0x5] sm:$0x1] %vm172, %v642
    %s644 = sadd.s32 %s77, 6
    %s645 = sld [smem:[#allocation4 + %s644]]
    %s646 = sld [smem:[#allocation5 + %s644]]
    %s647 = scalar_lea.vmem [#allocation6], %s646
    %v648 = vld [vmem:[%s647] sm:$0xff]
    %v649 = vstv %s645
    %vm650 = vcmp.eq.s32.totalorder %v67, %v649
    %vm651 = vcmp.eq.s32.totalorder %v68, %v649
    %v652 = vsel %vm650, 1, 0
    %v653 = vsel %vm651, 1, 0
    %v654 = vcvt.s32.f32 %v652
    %v655 = vcvt.s32.f32 %v653
    %v657 = vsel %vm89, %v648, 0
    %659 = vmatprep.subr.mxu0 0.0
    %660 = vmatpush1.msra.mxu0 %v654
    %661 = vmatprep.subr.mxu0 0.0
    %662 = vmatpush1.msra.mxu0 %v655
    %663 = vmatprep.subr.mxu0 0.0
    %664 = vmatpush1.msra.mxu0 0.0
    %665 = vmatprep.subr.mxu0 0.0
    %666 = vmatpush1.msra.mxu0 0.0
    %667 = vmatprep.subr.mxu0 0.0
    %668 = vmatpush1.msra.mxu0 0.0
    %669 = vmatprep.subr.mxu0 0.0
    %670 = vmatpush1.msra.mxu0 0.0
    %671 = vmatprep.subr.mxu0 0.0
    %672 = vmatpush1.msra.mxu0 0.0
    %673 = vmatprep.subr.mxu0 0.0
    %674 = vmatpush1.msra.mxu0 0.0
    %675 = vmatprep.subr.mxu0 0.0
    %676 = vmatpush1.msra.mxu0 0.0
    %677 = vmatprep.subr.mxu0 0.0
    %678 = vmatpush1.msra.mxu0 0.0
    %679 = vmatprep.subr.mxu0 0.0
    %680 = vmatpush1.msra.mxu0 0.0
    %681 = vmatprep.subr.mxu0 0.0
    %682 = vmatpush1.msra.mxu0 0.0
    %683 = vmatprep.subr.mxu0 0.0
    %684 = vmatpush1.msra.mxu0 0.0
    %685 = vmatprep.subr.mxu0 0.0
    %686 = vmatpush1.msra.mxu0 0.0
    %687 = vmatprep.subr.mxu0 0.0
    %688 = vmatpush1.msra.mxu0 0.0
    %689 = vmatprep.subr.mxu0 0.0
    %690 = vmatpush1.msra.mxu0 0.0
    %691 = vmatprep.subr.mxu0 0.0
    %692 = vmatpush1.msra.mxu0 0.0
    %693 = vmatprep.subr.mxu0 0.0
    %694 = vmatpush1.msra.mxu0 0.0
    %695 = vmatprep.subr.mxu0 0.0
    %696 = vmatpush1.msra.mxu0 0.0
    %697 = vmatprep.subr.mxu0 0.0
    %698 = vmatpush1.msra.mxu0 0.0
    %699 = vmatprep.subr.mxu0 0.0
    %700 = vmatpush1.msra.mxu0 0.0
    %701 = vmatprep.subr.mxu0 0.0
    %702 = vmatpush1.msra.mxu0 0.0
    %703 = vmatprep.subr.mxu0 0.0
    %704 = vmatpush1.msra.mxu0 0.0
    %705 = vmatprep.subr.mxu0 0.0
    %706 = vmatpush1.msra.mxu0 0.0
    %707 = vmatprep.subr.mxu0 0.0
    %708 = vmatpush1.msra.mxu0 0.0
    %709 = vmatprep.subr.mxu0 0.0
    %710 = vmatpush1.msra.mxu0 0.0
    %711 = vmatprep.subr.mxu0 0.0
    %712 = vmatpush1.msra.mxu0 0.0
    %713 = vmatprep.subr.mxu0 0.0
    %714 = vmatpush1.msra.mxu0 0.0
    %715 = vmatprep.subr.mxu0 0.0
    %716 = vmatpush1.msra.mxu0 0.0
    %717 = vmatprep.subr.mxu0 0.0
    %718 = vmatpush1.msra.mxu0 0.0
    %719 = vmatprep.subr.mxu0 0.0
    %720 = vmatpush1.msra.mxu0 0.0
    %721 = vmatprep.subr.mxu0 0.0
    %722 = vmatpush1.msra.mxu0 0.0
    %723 = vmatprep.mubr.f32.mxu0 0.0
    %724 = vmatmul.mubr.f32.gmra.mrb[0].mxu0 %v657
    %v725 = vpop.f32.mrb[0].mxu0
    %v726 = vadd.f32 0.0, %v725
    %v727 = vpop.f32.mrb[0].mxu0
    %728 = vdwg.mxu0
    %v729 = vmul.f32 %v726, %v76
    %v730 = vsel %vm164, %v729, 0.0
    %v731 = vrot.slane %v730, 4
    %v732 = vadd.f32 %v730, %v731
    %v733 = vrot.slane %v732, 2
    %v734 = vadd.f32 %v732, %v733
    %v735 = vrot.slane %v734, 1
    %v736 = vadd.f32 %v734, %v735
    %737 = vst.msk [vmem:[#allocation2 + $0x6] sm:$0x1] %vm172, %v736
    %s738 = sadd.s32 %s77, 7
    %s739 = sld [smem:[#allocation4 + %s738]]
    %s740 = sld [smem:[#allocation5 + %s738]]
    %s741 = scalar_lea.vmem [#allocation6], %s740
    %v742 = vld [vmem:[%s741] sm:$0xff]
    %v743 = vstv %s739
    %vm744 = vcmp.eq.s32.totalorder %v67, %v743
    %vm745 = vcmp.eq.s32.totalorder %v68, %v743
    %v746 = vsel %vm744, 1, 0
    %v747 = vsel %vm745, 1, 0
    %v748 = vcvt.s32.f32 %v746
    %v749 = vcvt.s32.f32 %v747
    %v751 = vsel %vm89, %v742, 0
    %753 = vmatprep.subr.mxu0 0.0
    %754 = vmatpush1.msra.mxu0 %v748
    %755 = vmatprep.subr.mxu0 0.0
    %756 = vmatpush1.msra.mxu0 %v749
    %757 = vmatprep.subr.mxu0 0.0
    %758 = vmatpush1.msra.mxu0 0.0
    %759 = vmatprep.subr.mxu0 0.0
    %760 = vmatpush1.msra.mxu0 0.0
    %761 = vmatprep.subr.mxu0 0.0
    %762 = vmatpush1.msra.mxu0 0.0
    %763 = vmatprep.subr.mxu0 0.0
    %764 = vmatpush1.msra.mxu0 0.0
    %765 = vmatprep.subr.mxu0 0.0
    %766 = vmatpush1.msra.mxu0 0.0
    %767 = vmatprep.subr.mxu0 0.0
    %768 = vmatpush1.msra.mxu0 0.0
    %769 = vmatprep.subr.mxu0 0.0
    %770 = vmatpush1.msra.mxu0 0.0
    %771 = vmatprep.subr.mxu0 0.0
    %772 = vmatpush1.msra.mxu0 0.0
    %773 = vmatprep.subr.mxu0 0.0
    %774 = vmatpush1.msra.mxu0 0.0
    %775 = vmatprep.subr.mxu0 0.0
    %776 = vmatpush1.msra.mxu0 0.0
    %777 = vmatprep.subr.mxu0 0.0
    %778 = vmatpush1.msra.mxu0 0.0
    %779 = vmatprep.subr.mxu0 0.0
    %780 = vmatpush1.msra.mxu0 0.0
    %781 = vmatprep.subr.mxu0 0.0
    %782 = vmatpush1.msra.mxu0 0.0
    %783 = vmatprep.subr.mxu0 0.0
    %784 = vmatpush1.msra.mxu0 0.0
    %785 = vmatprep.subr.mxu0 0.0
    %786 = vmatpush1.msra.mxu0 0.0
    %787 = vmatprep.subr.mxu0 0.0
    %788 = vmatpush1.msra.mxu0 0.0
    %789 = vmatprep.subr.mxu0 0.0
    %790 = vmatpush1.msra.mxu0 0.0
    %791 = vmatprep.subr.mxu0 0.0
    %792 = vmatpush1.msra.mxu0 0.0
    %793 = vmatprep.subr.mxu0 0.0
    %794 = vmatpush1.msra.mxu0 0.0
    %795 = vmatprep.subr.mxu0 0.0
    %796 = vmatpush1.msra.mxu0 0.0
    %797 = vmatprep.subr.mxu0 0.0
    %798 = vmatpush1.msra.mxu0 0.0
    %799 = vmatprep.subr.mxu0 0.0
    %800 = vmatpush1.msra.mxu0 0.0
    %801 = vmatprep.subr.mxu0 0.0
    %802 = vmatpush1.msra.mxu0 0.0
    %803 = vmatprep.subr.mxu0 0.0
    %804 = vmatpush1.msra.mxu0 0.0
    %805 = vmatprep.subr.mxu0 0.0
    %806 = vmatpush1.msra.mxu0 0.0
    %807 = vmatprep.subr.mxu0 0.0
    %808 = vmatpush1.msra.mxu0 0.0
    %809 = vmatprep.subr.mxu0 0.0
    %810 = vmatpush1.msra.mxu0 0.0
    %811 = vmatprep.subr.mxu0 0.0
    %812 = vmatpush1.msra.mxu0 0.0
    %813 = vmatprep.subr.mxu0 0.0
    %814 = vmatpush1.msra.mxu0 0.0
    %815 = vmatprep.subr.mxu0 0.0
    %816 = vmatpush1.msra.mxu0 0.0
    %817 = vmatprep.mubr.f32.mxu0 0.0
    %818 = vmatmul.mubr.f32.gmra.mrb[0].mxu0 %v751
    %v819 = vpop.f32.mrb[0].mxu0
    %v820 = vadd.f32 0.0, %v819
    %v821 = vpop.f32.mrb[0].mxu0
    %822 = vdwg.mxu0
    %v823 = vmul.f32 %v820, %v76
    %v824 = vsel %vm164, %v823, 0.0
    %v825 = vrot.slane %v824, 4
    %v826 = vadd.f32 %v824, %v825
    %v827 = vrot.slane %v826, 2
    %v828 = vadd.f32 %v826, %v827
    %v829 = vrot.slane %v828, 1
    %v830 = vadd.f32 %v828, %v829
    %831 = vst.msk [vmem:[#allocation2 + $0x7] sm:$0x1] %vm172, %v830
    %v832 = vld [vmem:[#allocation2] sm:$0xff]
    %v833 = vld [vmem:[#allocation9] sm:$0xff]
    %v834 = vld [vmem:[#allocation9 + $0x8] sm:$0xff]
    %v835 = vld [vmem:[#allocation9 + $0x10] sm:$0xff]
    %v836 = vld [vmem:[#allocation9 + $0x18] sm:$0xff]
    %v837 = vld [vmem:[#allocation9 + $0x20] sm:$0xff]
    %v838 = vld [vmem:[#allocation9 + $0x28] sm:$0xff]
    %v839 = vld [vmem:[#allocation9 + $0x30] sm:$0xff]
    %v840 = vld [vmem:[#allocation9 + $0x38] sm:$0xff]
    %v841 = vld [vmem:[%s4] sm:$0x1]
    %v843 = vlaneseq
    %v844 = vshrl.u32 %v843, 7
    %v845 = vsub.s32 0, %v844
    %v846 = vrot.slane %v841, %v845
    %v849 = vsel %vm164, %v832, 0
    %851 = vmatprep.subr.mxu0 0.0
    %852 = vmatpush1.msra.mxu0 %v833
    %853 = vmatprep.subr.mxu0 0.0
    %854 = vmatpush1.msra.mxu0 %v834
    %855 = vmatprep.subr.mxu0 0.0
    %856 = vmatpush1.msra.mxu0 %v835
    %857 = vmatprep.subr.mxu0 0.0
    %858 = vmatpush1.msra.mxu0 %v836
    %859 = vmatprep.subr.mxu0 0.0
    %860 = vmatpush1.msra.mxu0 %v837
    %861 = vmatprep.subr.mxu0 0.0
    %862 = vmatpush1.msra.mxu0 %v838
    %863 = vmatprep.subr.mxu0 0.0
    %864 = vmatpush1.msra.mxu0 %v839
    %865 = vmatprep.subr.mxu0 0.0
    %866 = vmatpush1.msra.mxu0 %v840
    %867 = vmatprep.subr.mxu0 0.0
    %868 = vmatpush1.msra.mxu0 0.0
    %869 = vmatprep.subr.mxu0 0.0
    %870 = vmatpush1.msra.mxu0 0.0
    %871 = vmatprep.subr.mxu0 0.0
    %872 = vmatpush1.msra.mxu0 0.0
    %873 = vmatprep.subr.mxu0 0.0
    %874 = vmatpush1.msra.mxu0 0.0
    %875 = vmatprep.subr.mxu0 0.0
    %876 = vmatpush1.msra.mxu0 0.0
    %877 = vmatprep.subr.mxu0 0.0
    %878 = vmatpush1.msra.mxu0 0.0
    %879 = vmatprep.subr.mxu0 0.0
    %880 = vmatpush1.msra.mxu0 0.0
    %881 = vmatprep.subr.mxu0 0.0
    %882 = vmatpush1.msra.mxu0 0.0
    %883 = vmatprep.subr.mxu0 0.0
    %884 = vmatpush1.msra.mxu0 0.0
    %885 = vmatprep.subr.mxu0 0.0
    %886 = vmatpush1.msra.mxu0 0.0
    %887 = vmatprep.subr.mxu0 0.0
    %888 = vmatpush1.msra.mxu0 0.0
    %889 = vmatprep.subr.mxu0 0.0
    %890 = vmatpush1.msra.mxu0 0.0
    %891 = vmatprep.subr.mxu0 0.0
    %892 = vmatpush1.msra.mxu0 0.0
    %893 = vmatprep.subr.mxu0 0.0
    %894 = vmatpush1.msra.mxu0 0.0
    %895 = vmatprep.subr.mxu0 0.0
    %896 = vmatpush1.msra.mxu0 0.0
    %897 = vmatprep.subr.mxu0 0.0
    %898 = vmatpush1.msra.mxu0 0.0
    %899 = vmatprep.subr.mxu0 0.0
    %900 = vmatpush1.msra.mxu0 0.0
    %901 = vmatprep.subr.mxu0 0.0
    %902 = vmatpush1.msra.mxu0 0.0
    %903 = vmatprep.subr.mxu0 0.0
    %904 = vmatpush1.msra.mxu0 0.0
    %905 = vmatprep.subr.mxu0 0.0
    %906 = vmatpush1.msra.mxu0 0.0
    %907 = vmatprep.subr.mxu0 0.0
    %908 = vmatpush1.msra.mxu0 0.0
    %909 = vmatprep.subr.mxu0 0.0
    %910 = vmatpush1.msra.mxu0 0.0
    %911 = vmatprep.subr.mxu0 0.0
    %912 = vmatpush1.msra.mxu0 0.0
    %913 = vmatprep.subr.mxu0 0.0
    %914 = vmatpush1.msra.mxu0 0.0
    %915 = vmatprep.mubr.f32.mxu0 0.0
    %916 = vmatmul.mubr.f32.gmra.mrb[0].mxu0 %v849
    %v917 = vpop.f32.mrb[0].mxu0
    %v918 = vadd.f32 %v846, %v917
    %v919 = vpop.f32.mrb[0].mxu0
    %920 = vdwg.mxu0
    %921 = vst [vmem:[#allocation11] sm:$0xff] %v918
    // Predicated region
    $region30: #{tpu_custom_call.1} parent=1 // pred_check
      _
    $region31: #{tpu_custom_call.1} parent=1 // pred_check_branch
      %923 = sbr.rel (0) target = $region33
    $region32: #{tpu_custom_call.1} parent=1 // pred_region
      %s925 = ssub.s32 128, 128
      %926 = vsyncadd [#allocation8], %s925
      %s928 = sshll.u32 [#allocation11], 4
      %s929 = int_to_ptr.vmem [resolvable:$true] %s928
      %931 = dma.vmem_to_hbm [thread:$0]  %s929, 128, %s7, [#allocation8]
    $region33: #{tpu_custom_call.1} parent=1 // pred_fallthru
      _
    // Predicated region
    $region34: #{tpu_custom_call.1} parent=1 // pred_check
      _
    $region35: #{tpu_custom_call.1} parent=1 // pred_check_branch
      %933 = sbr.rel (0) target = $region37
    $region36: #{tpu_custom_call.1} parent=1 // pred_region
      %934 = dma.done [#allocation8], 128
    $region37: #{tpu_custom_call.1} parent=1 // pred_fallthru
      _
    %935 = vsyncpa [#allocation7], 1
    %936 = vsyncpa [#allocation10], 1
    %937 = vsyncpa [#allocation8], 1

</llo_original>
